<compile_context>
chip_gen: v5e
topology: v5e:2x2
jax: 0.10.0
libtpu: 0.0.40
codegen_flags: <defaults>
</compile_context>

<pallas_src>
import functools

import jax
import jax.numpy as jnp
from jax.experimental import pallas as pl
from jax.experimental.pallas import tpu as pltpu


REPEATS = 9


# --------------------------------------------------------------------------
# helpers
# --------------------------------------------------------------------------
def _round_up(x: int, m: int) -> int:
    return -(-x // m) * m


def _sublane_tile(dtype) -> int:
    # sublane packing of the second-minor dim: f32 -> 8 rows, bf16 -> 16, i8/fp8 -> 32
    return max(8, 32 // jnp.dtype(dtype).itemsize)


def _divisors_desc(n: int):
    return [d for d in range(n, 0, -1) if n % d == 0]


def _vmem_budgets():
    """(fan-out 2-buffer budget, auto-path 4-buffer budget) in bytes, per generation."""
    fan, auto = 8 << 20, 12 << 20                  # conservative: safe on v5e/v6e/v7x
    try:
        cap = pltpu.get_tpu_info().vmem_capacity_bytes   # 128 MiB v5e/v6e, 64 MiB v7x
        fan = min(16 << 20, max(8 << 20, cap // 8))
        auto = min(24 << 20, max(12 << 20, cap // 6))
    except Exception:
        pass
    return fan, auto


def _plan_fanout(N, C, HW, itemsize, dtype, budget):
    """Pick (batch chunk, lane tile) for the DMA fan-out path. TL divides HW."""
    c_pad = _round_up(C, _sublane_tile(dtype))     # real VMEM rows incl. sublane pad
    hw128 = HW // 128
    # Batch chunk: largest divisor of N whose 2 input buffers fit at a 512-lane tile.
    target_tl = min(HW, 512)
    nb = 1
    for d in _divisors_desc(N):
        if 2 * d * c_pad * target_tl * itemsize <= budget:
            nb = d
            break
    per_lane = 2 * nb * c_pad * itemsize
    max_d = max(1, (budget // per_lane) // 128)    # max tile, in units of 128 lanes
    # Tile must divide HW exactly (manual DMA -> no masked remainder); force >= 2
    # spatial tiles so both v7x TensorCores stream output DMAs; prefer 512-lane mults.
    cand = [d for d in _divisors_desc(hw128)
            if d <= max_d and (hw128 == 1 or d < hw128)]
    if not cand:
        cand = [1]
    mult512 = [d for d in cand if d % 4 == 0]
    tl = 128 * (mult512[0] if mult512 else cand[0])
    # TODO(synk): for extreme C (c_pad*128*itemsize alone > budget) add a C-chunk axis.
    return nb, tl


def _plan_auto(N, C, HW, itemsize, dtype, budget):
    """Pick (batch chunk, lane tile) for the auto-pipelined fallback (masked OK)."""
    c_pad = _round_up(C, _sublane_tile(dtype))
    nb = 1
    for d in _divisors_desc(N):
        if 4 * d * c_pad * min(HW, 512) * itemsize <= budget:
            nb = d
            break
    per_lane = 4 * nb * c_pad * itemsize           # 2 in + 2 out double-buffers
    max_tl = max(128, (budget // per_lane) // 128 * 128)
    if HW <= max_tl:
        if HW >= 256:
            tl = max(128, _round_up(-(-HW // 2), 128))   # ~half, 128-aligned -> >=2 tiles
        else:
            tl = HW                                       # full extent (always legal)
    else:
        tl = max_tl if max_tl < 512 else (max_tl // 512) * 512
    return nb, tl


# --------------------------------------------------------------------------
# kernels
# --------------------------------------------------------------------------
def _fast_kernel(x_ref, o_ref, *, repeats):
    # Whole tensor resident in VMEM: fan the input out to all replicas.
    x = x_ref[...]                                  # (N, C, HW)
    for r in range(repeats):                        # static unroll
        o_ref[:, r, :, :] = x


def _fanout_kernel(x_ref, o_hbm, sems, *, repeats, nb, tl):
    # One grid step = (batch chunk b, spatial tile j).  x_ref is the auto-pipelined
    # VMEM input tile (nb, C, tl); o_hbm is the full (N, repeats*C, HW) HBM output.
    c = x_ref.shape[1]
    n0 = pl.multiple_of(pl.program_id(0) * nb, nb)
    col = pl.multiple_of(pl.program_id(1) * tl, tl)
    copies = []
    for r in range(repeats):                        # static unroll: 9 concurrent DMAs
        cp = pltpu.make_async_copy(
            x_ref,
            o_hbm.at[pl.ds(n0, nb), pl.ds(r * c, c), pl.ds(col, tl)],
            sems.at[r],
        )
        cp.start()
        copies.append(cp)
    for cp in copies:
        cp.wait()


def _copy_kernel(x_ref, o_ref):
    # One grid step = (batch chunk, spatial tile j, replica r): stream the tile through.
    o_ref[...] = x_ref[...]


# --------------------------------------------------------------------------
# wrapper
# --------------------------------------------------------------------------
def det_cnn_t12_fod_fake(img: jax.Array, *, repeats: int = REPEATS,
                         force_path: str | None = None) -> jax.Array:
    """Pallas implementation of torch.cat((img,)*9, dim=1) for NCHW input."""
    N, C, H, W = img.shape
    HW = H * W
    itemsize = img.dtype.itemsize
    c_pad = _round_up(C, _sublane_tile(img.dtype))
    hw_pad = _round_up(HW, 128)

    x = img.reshape(N, C, HW)                       # contiguous NCHW -> metadata-only
    cost = pl.CostEstimate(
        flops=0, transcendentals=0,
        bytes_accessed=(1 + repeats) * N * C * HW * itemsize)
    vmem_limit = 32 << 20                           # safe on v5e / v6e / v7x
    budget_fan, budget_auto = _vmem_budgets()

    path = force_path
    if path is None:
        padded_total = (1 + repeats) * N * c_pad * hw_pad * itemsize
        if padded_total <= (8 << 20):
            path = "fast"
        elif HW % 128 == 0:
            path = "fanout"
        else:
            path = "auto"

    if path == "fast":
        out4 = pl.pallas_call(
            functools.partial(_fast_kernel, repeats=repeats),
            out_shape=jax.ShapeDtypeStruct((N, repeats, C, HW), img.dtype),
            grid=(1,),
            in_specs=[pl.BlockSpec((N, C, HW), lambda i: (0, 0, 0))],
            out_specs=pl.BlockSpec((N, repeats, C, HW), lambda i: (0, 0, 0, 0)),
            compiler_params=pltpu.CompilerParams(
                dimension_semantics=("arbitrary",),
                vmem_limit_bytes=vmem_limit),
            cost_estimate=cost,
        )(x)
        return out4.reshape(N, repeats * C, H, W)

    if path == "fanout":
        assert HW % 128 == 0, "fan-out path needs HW % 128 == 0"
        nb, tl = _plan_fanout(N, C, HW, itemsize, img.dtype, budget_fan)
        out3 = pl.pallas_call(
            functools.partial(_fanout_kernel, repeats=repeats, nb=nb, tl=tl),
            out_shape=jax.ShapeDtypeStruct((N, repeats * C, HW), img.dtype),
            grid=(N // nb, HW // tl),
            in_specs=[pl.BlockSpec((nb, C, tl), lambda b, j: (b, 0, j))],
            out_specs=pl.BlockSpec(memory_space=pl.ANY),
            scratch_shapes=[pltpu.SemaphoreType.DMA((repeats,))],
            compiler_params=pltpu.CompilerParams(
                dimension_semantics=("parallel", "parallel"),
                vmem_limit_bytes=vmem_limit),
            cost_estimate=cost,
        )(x)
        return out3.reshape(N, repeats * C, H, W)

    # "auto": auto-pipelined per-replica copy (handles ragged HW via masked writes).
    nb, tl = _plan_auto(N, C, HW, itemsize, img.dtype, budget_auto)
    num_tiles = pl.cdiv(HW, tl)
    out4 = pl.pallas_call(
        _copy_kernel,
        out_shape=jax.ShapeDtypeStruct((N, repeats, C, HW), img.dtype),
        grid=(N // nb, num_tiles, repeats),          # repeats innermost -> input re-use
        in_specs=[pl.BlockSpec((nb, C, tl), lambda b, j, r: (b, 0, j))],
        out_specs=pl.BlockSpec((nb, None, C, tl), lambda b, j, r: (b, r, 0, j)),
        compiler_params=pltpu.CompilerParams(
            dimension_semantics=("parallel", "parallel", "arbitrary"),
            vmem_limit_bytes=vmem_limit),
        cost_estimate=cost,
    )(x)
    return out4.reshape(N, repeats * C, H, W)


# --------------------------------------------------------------------------
# self-test
# --------------------------------------------------------------------------
if __name__ == "__main__":
    key = jax.random.PRNGKey(0)
    # Small NCHW input consistent with a conv-style module: batch=2, ch=4, 16x16
    x = jax.random.normal(key, (2, 4, 16, 16), dtype=jnp.float32)
    ref = jnp.concatenate([x] * 9, axis=1)           # torch.cat(dim=1) semantics

    # Fast (single-step) path.
    out_fast = jax.block_until_ready(det_cnn_t12_fod_fake(x))
    assert out_fast.shape == (2, 36, 16, 16), out_fast.shape
    assert out_fast.dtype == x.dtype
    assert jnp.array_equal(out_fast, ref), "fast path mismatch vs reference concat"

    # DMA fan-out path (what large 128-divisible images take).
    out_fan = jax.block_until_ready(det_cnn_t12_fod_fake(x, force_path="fanout"))
    assert out_fan.shape == (2, 36, 16, 16)
    assert jnp.array_equal(out_fan, ref), "fan-out path mismatch vs reference concat"

    # Auto-pipelined fallback path.
    out_auto = jax.block_until_ready(det_cnn_t12_fod_fake(x, force_path="auto"))
    assert jnp.array_equal(out_auto, ref), "auto path mismatch vs reference concat"

    # Ragged spatial extent (HW not a multiple of 128) exercises the masked fallback.
    x2 = jax.random.normal(jax.random.PRNGKey(0), (2, 3, 5, 7), dtype=jnp.float32)
    ref2 = jnp.concatenate([x2] * 9, axis=1)
    out2 = jax.block_until_ready(det_cnn_t12_fod_fake(x2, force_path="auto"))
    assert out2.shape == (2, 27, 5, 7)
    assert jnp.array_equal(out2, ref2), "ragged auto path mismatch vs reference concat"

    print("KERNEL_OK")
</pallas_src>

<mosaic_0001>
module attributes {stable_mosaic.version = 11 : i64} {
  func.func @_fast_kernel(%arg0: i32, %arg1: memref<2x4x256xf32, #tpu.memory_space<vmem>>, %arg2: memref<2x9x4x256xf32, #tpu.memory_space<vmem>>) attributes {dimension_semantics = [#tpu.dimension_semantics<arbitrary>], iteration_bounds = array<i64: 1>, scalar_prefetch = 0 : i64, scratch_operands = 0 : i64, tpu.core_type = #tpu.core_type<tc>, window_params = [{pipeline_mode = #tpu.pipeline_mode<synchronous>, transform_indices = @transform_0, window_bounds = array<i64: 2, 4, 256>}, {pipeline_mode = #tpu.pipeline_mode<synchronous>, transform_indices = @transform_1, window_bounds = array<i64: 2, 9, 4, 256>}]} {
    %c0 = arith.constant 0 : index
    %c0_0 = arith.constant 0 : index
    %c0_1 = arith.constant 0 : index
    %0 = vector.load %arg1[%c0, %c0_0, %c0_1] : memref<2x4x256xf32, #tpu.memory_space<vmem>>, vector<2x4x256xf32>
    %c0_2 = arith.constant 0 : index
    %c0_3 = arith.constant 0 : index
    %c0_4 = arith.constant 0 : index
    %c0_5 = arith.constant 0 : index
    %1 = vector.load %arg2[%c0_2, %c0_3, %c0_4, %c0_5] : memref<2x9x4x256xf32, #tpu.memory_space<vmem>>, vector<2x1x4x256xf32>
    %2 = vector.shape_cast %1 : vector<2x1x4x256xf32> to vector<2x4x256xf32>
    %3 = vector.shape_cast %0 : vector<2x4x256xf32> to vector<2x1x4x256xf32>
    tpu.vector_store %arg2[%c0_2, %c0_3, %c0_4, %c0_5], %3 {strides = array<i32>} : memref<2x9x4x256xf32, #tpu.memory_space<vmem>>, vector<2x1x4x256xf32>,
    %c0_6 = arith.constant 0 : index
    %c1 = arith.constant 1 : index
    %c0_7 = arith.constant 0 : index
    %c0_8 = arith.constant 0 : index
    %4 = vector.load %arg2[%c0_6, %c1, %c0_7, %c0_8] : memref<2x9x4x256xf32, #tpu.memory_space<vmem>>, vector<2x1x4x256xf32>
    %5 = vector.shape_cast %4 : vector<2x1x4x256xf32> to vector<2x4x256xf32>
    %6 = vector.shape_cast %0 : vector<2x4x256xf32> to vector<2x1x4x256xf32>
    tpu.vector_store %arg2[%c0_6, %c1, %c0_7, %c0_8], %6 {strides = array<i32>} : memref<2x9x4x256xf32, #tpu.memory_space<vmem>>, vector<2x1x4x256xf32>,
    %c0_9 = arith.constant 0 : index
    %c2 = arith.constant 2 : index
    %c0_10 = arith.constant 0 : index
    %c0_11 = arith.constant 0 : index
    %7 = vector.load %arg2[%c0_9, %c2, %c0_10, %c0_11] : memref<2x9x4x256xf32, #tpu.memory_space<vmem>>, vector<2x1x4x256xf32>
    %8 = vector.shape_cast %7 : vector<2x1x4x256xf32> to vector<2x4x256xf32>
    %9 = vector.shape_cast %0 : vector<2x4x256xf32> to vector<2x1x4x256xf32>
    tpu.vector_store %arg2[%c0_9, %c2, %c0_10, %c0_11], %9 {strides = array<i32>} : memref<2x9x4x256xf32, #tpu.memory_space<vmem>>, vector<2x1x4x256xf32>,
    %c0_12 = arith.constant 0 : index
    %c3 = arith.constant 3 : index
    %c0_13 = arith.constant 0 : index
    %c0_14 = arith.constant 0 : index
    %10 = vector.load %arg2[%c0_12, %c3, %c0_13, %c0_14] : memref<2x9x4x256xf32, #tpu.memory_space<vmem>>, vector<2x1x4x256xf32>
    %11 = vector.shape_cast %10 : vector<2x1x4x256xf32> to vector<2x4x256xf32>
    %12 = vector.shape_cast %0 : vector<2x4x256xf32> to vector<2x1x4x256xf32>
    tpu.vector_store %arg2[%c0_12, %c3, %c0_13, %c0_14], %12 {strides = array<i32>} : memref<2x9x4x256xf32, #tpu.memory_space<vmem>>, vector<2x1x4x256xf32>,
    %c0_15 = arith.constant 0 : index
    %c4 = arith.constant 4 : index
    %c0_16 = arith.constant 0 : index
    %c0_17 = arith.constant 0 : index
    %13 = vector.load %arg2[%c0_15, %c4, %c0_16, %c0_17] : memref<2x9x4x256xf32, #tpu.memory_space<vmem>>, vector<2x1x4x256xf32>
    %14 = vector.shape_cast %13 : vector<2x1x4x256xf32> to vector<2x4x256xf32>
    %15 = vector.shape_cast %0 : vector<2x4x256xf32> to vector<2x1x4x256xf32>
    tpu.vector_store %arg2[%c0_15, %c4, %c0_16, %c0_17], %15 {strides = array<i32>} : memref<2x9x4x256xf32, #tpu.memory_space<vmem>>, vector<2x1x4x256xf32>,
    %c0_18 = arith.constant 0 : index
    %c5 = arith.constant 5 : index
    %c0_19 = arith.constant 0 : index
    %c0_20 = arith.constant 0 : index
    %16 = vector.load %arg2[%c0_18, %c5, %c0_19, %c0_20] : memref<2x9x4x256xf32, #tpu.memory_space<vmem>>, vector<2x1x4x256xf32>
    %17 = vector.shape_cast %16 : vector<2x1x4x256xf32> to vector<2x4x256xf32>
    %18 = vector.shape_cast %0 : vector<2x4x256xf32> to vector<2x1x4x256xf32>
    tpu.vector_store %arg2[%c0_18, %c5, %c0_19, %c0_20], %18 {strides = array<i32>} : memref<2x9x4x256xf32, #tpu.memory_space<vmem>>, vector<2x1x4x256xf32>,
    %c0_21 = arith.constant 0 : index
    %c6 = arith.constant 6 : index
    %c0_22 = arith.constant 0 : index
    %c0_23 = arith.constant 0 : index
    %19 = vector.load %arg2[%c0_21, %c6, %c0_22, %c0_23] : memref<2x9x4x256xf32, #tpu.memory_space<vmem>>, vector<2x1x4x256xf32>
    %20 = vector.shape_cast %19 : vector<2x1x4x256xf32> to vector<2x4x256xf32>
    %21 = vector.shape_cast %0 : vector<2x4x256xf32> to vector<2x1x4x256xf32>
    tpu.vector_store %arg2[%c0_21, %c6, %c0_22, %c0_23], %21 {strides = array<i32>} : memref<2x9x4x256xf32, #tpu.memory_space<vmem>>, vector<2x1x4x256xf32>,
    %c0_24 = arith.constant 0 : index
    %c7 = arith.constant 7 : index
    %c0_25 = arith.constant 0 : index
    %c0_26 = arith.constant 0 : index
    %22 = vector.load %arg2[%c0_24, %c7, %c0_25, %c0_26] : memref<2x9x4x256xf32, #tpu.memory_space<vmem>>, vector<2x1x4x256xf32>
    %23 = vector.shape_cast %22 : vector<2x1x4x256xf32> to vector<2x4x256xf32>
    %24 = vector.shape_cast %0 : vector<2x4x256xf32> to vector<2x1x4x256xf32>
    tpu.vector_store %arg2[%c0_24, %c7, %c0_25, %c0_26], %24 {strides = array<i32>} : memref<2x9x4x256xf32, #tpu.memory_space<vmem>>, vector<2x1x4x256xf32>,
    %c0_27 = arith.constant 0 : index
    %c8 = arith.constant 8 : index
    %c0_28 = arith.constant 0 : index
    %c0_29 = arith.constant 0 : index
    %25 = vector.load %arg2[%c0_27, %c8, %c0_28, %c0_29] : memref<2x9x4x256xf32, #tpu.memory_space<vmem>>, vector<2x1x4x256xf32>
    %26 = vector.shape_cast %25 : vector<2x1x4x256xf32> to vector<2x4x256xf32>
    %27 = vector.shape_cast %0 : vector<2x4x256xf32> to vector<2x1x4x256xf32>
    tpu.vector_store %arg2[%c0_27, %c8, %c0_28, %c0_29], %27 {strides = array<i32>} : memref<2x9x4x256xf32, #tpu.memory_space<vmem>>, vector<2x1x4x256xf32>,
    return
  }
  func.func @transform_0(%arg0: i32) -> (i32, i32, i32) {
    %c0_i32 = arith.constant 0 : i32
    %c0_i32_0 = arith.constant 0 : i32
    %c0_i32_1 = arith.constant 0 : i32
    %c0_i32_2 = arith.constant 0 : i32
    return %c0_i32, %c0_i32_0, %c0_i32_1 : i32, i32, i32
  }
  func.func @transform_1(%arg0: i32) -> (i32, i32, i32, i32) {
    %c0_i32 = arith.constant 0 : i32
    %c0_i32_0 = arith.constant 0 : i32
    %c0_i32_1 = arith.constant 0 : i32
    %c0_i32_2 = arith.constant 0 : i32
    %c0_i32_3 = arith.constant 0 : i32
    return %c0_i32, %c0_i32_0, %c0_i32_1, %c0_i32_2 : i32, i32, i32, i32
  }
}

</mosaic_0001>

<llo_original>
// kernel: tpu_custom_call.1
$region0: #{tpu_custom_call.1}
  #allocation0 [shape = 'u32[]', space=smem, size = 0x4, offset = 0x4, fixed_abs, tag = 'smem constant byte address 0x4 - core index']
  #allocation1 [shape = 'u32[72,128]{1,0:T(1,128)}', space=vmem, size = 0x9000, scoped, tag = 'internal scratch']
  %s0 = inlined_call_operand.hbm [shape: f32[2,4,256], index: 0, kind: input, shape index: {}]
  %s1 = inlined_call_operand.hbm [shape: f32[2,9,4,256], index: 1, kind: output, shape index: {}]
  %s2 = sld [smem:[#allocation0]]
  $region18: #{tpu_custom_call.1} parent=0
    _
  %s4 = ssub.s32 1, %s2
  %s5 = scalar_select 0, %s4, %s2
  $region1: #{tpu_custom_call.1} parent=0
    #allocation2 [shape = 'u8[8192]{0}', space=vmem, size = 0x2000, scoped, tag = 'input window, operand 0, single buffered']
    #allocation3 [shape = 's32[1]{0}', space=sflag, size = 0x4, scoped, tag = 'scoped memory for tpu_custom_call.1']
    #allocation4 [shape = 's32[1]{0}', space=sflag, size = 0x4, scoped, tag = 'scoped memory for tpu_custom_call.1']
    #allocation5 [shape = 'u8[73728]{0}', space=vmem, size = 0x12000, scoped, tag = 'output window, operand 0, single buffered']
    %6 = vsyncpa [#allocation3], 0
    %7 = vsyncpa [#allocation4], 0
    // Predicated region
    $region2: #{tpu_custom_call.1} parent=1 // pred_check
      _
    $region3: #{tpu_custom_call.1} parent=1 // pred_check_branch
      %9 = sbr.rel (0) target = $region5
    $region4: #{tpu_custom_call.1} parent=1 // pred_region
      %11 = vsyncadd [#allocation3], 0
      %s12 = sshll.u32 %s0, 4
      %s13 = int_to_ptr.hbm [resolvable:$true] %s12
      %s14 = sshll.u32 [#allocation2], 4
      %s15 = int_to_ptr.vmem [resolvable:$true] %s14
      %20 = dma.hbm_to_vmem [thread:$0]  %s13, 256, %s15, [#allocation3], 128, 128, 8
    $region5: #{tpu_custom_call.1} parent=1 // pred_fallthru
      _
    // Predicated region
    $region6: #{tpu_custom_call.1} parent=1 // pred_check
      _
    $region7: #{tpu_custom_call.1} parent=1 // pred_check_branch
      %22 = sbr.rel (0) target = $region9
    $region8: #{tpu_custom_call.1} parent=1 // pred_region
      %24 = dma.done [#allocation3], 256
    $region9: #{tpu_custom_call.1} parent=1 // pred_fallthru
      _
    %v25 = vld [vmem:[#allocation2] sm:$0xff]
    %v26 = vld [vmem:[#allocation2 + $0x8] sm:$0xff]
    %27 = vst [vmem:[#allocation5] sm:$0xff] %v25
    %28 = vst [vmem:[#allocation5 + $0x48] sm:$0xff] %v26
    %s29 = scalar_lea.vmem [#allocation5], 8
    %30 = vst [vmem:[%s29] sm:$0xff] %v25
    %31 = vst [vmem:[%s29 + $0x48] sm:$0xff] %v26
    %s32 = scalar_lea.vmem [#allocation5], 16
    %33 = vst [vmem:[%s32] sm:$0xff] %v25
    %34 = vst [vmem:[%s32 + $0x48] sm:$0xff] %v26
    %s35 = scalar_lea.vmem [#allocation5], 24
    %36 = vst [vmem:[%s35] sm:$0xff] %v25
    %37 = vst [vmem:[%s35 + $0x48] sm:$0xff] %v26
    %s38 = scalar_lea.vmem [#allocation5], 32
    %39 = vst [vmem:[%s38] sm:$0xff] %v25
    %40 = vst [vmem:[%s38 + $0x48] sm:$0xff] %v26
    %s41 = scalar_lea.vmem [#allocation5], 40
    %42 = vst [vmem:[%s41] sm:$0xff] %v25
    %43 = vst [vmem:[%s41 + $0x48] sm:$0xff] %v26
    %s44 = scalar_lea.vmem [#allocation5], 48
    %45 = vst [vmem:[%s44] sm:$0xff] %v25
    %46 = vst [vmem:[%s44 + $0x48] sm:$0xff] %v26
    %s47 = scalar_lea.vmem [#allocation5], 56
    %48 = vst [vmem:[%s47] sm:$0xff] %v25
    %49 = vst [vmem:[%s47 + $0x48] sm:$0xff] %v26
    %s50 = scalar_lea.vmem [#allocation5], 64
    %51 = vst [vmem:[%s50] sm:$0xff] %v25
    %52 = vst [vmem:[%s50 + $0x48] sm:$0xff] %v26
    // Predicated region
    $region10: #{tpu_custom_call.1} parent=1 // pred_check
      _
    $region11: #{tpu_custom_call.1} parent=1 // pred_check_branch
      %54 = sbr.rel (0) target = $region13
    $region12: #{tpu_custom_call.1} parent=1 // pred_region
      %56 = vsyncadd [#allocation4], 0
      %s57 = sshll.u32 [#allocation5], 4
      %s58 = int_to_ptr.vmem [resolvable:$true] %s57
      %s59 = sshll.u32 %s1, 4
      %s60 = int_to_ptr.hbm [resolvable:$true] %s59
      %65 = dma.vmem_to_hbm [thread:$0]  %s58, 2304, %s60, [#allocation4], 128, 128, 8
    $region13: #{tpu_custom_call.1} parent=1 // pred_fallthru
      _
    // Predicated region
    $region14: #{tpu_custom_call.1} parent=1 // pred_check
      _
    $region15: #{tpu_custom_call.1} parent=1 // pred_check_branch
      %67 = sbr.rel (0) target = $region17
    $region16: #{tpu_custom_call.1} parent=1 // pred_region
      %69 = dma.done [#allocation4], 2304
    $region17: #{tpu_custom_call.1} parent=1 // pred_fallthru
      _
    %70 = vsyncpa [#allocation3], 1
    %71 = vsyncpa [#allocation4], 1

</llo_original>
